<compile_context>
chip_gen: v5e
topology: v5e:2x2
jax: 0.10.0
libtpu: 0.0.40
codegen_flags: <defaults>
</compile_context>

<pallas_src>
import math

import jax
import jax.numpy as jnp
from jax.experimental import pallas as pl
from jax.experimental.pallas import tpu as pltpu


def _drop_path_kernel(scale_ref, x_ref, o_ref):
    # scale_ref: (TILE_B, 1) VMEM, already in x.dtype (mask / keep_prob)
    # x_ref / o_ref: (TILE_B, TILE_F) VMEM lane-dense slab
    o_ref[...] = x_ref[...] * scale_ref[...]


def _choose_tiles(B, F, itemsize, target_bytes=512 * 1024):
    """Pick a lane-dense, VMEM-bounded tile (~512 KiB per buffer)."""
    max_f_elems = max(128, target_bytes // itemsize)
    if F <= max_f_elems:
        tile_f = F                      # full feature axis (always legal)
    else:
        tile_f = (max_f_elems // 128) * 128   # lane-dense multiple of 128

    if B <= 8:
        tile_b = B                      # == full batch dim (legal sublane tile)
    else:
        # grow batch tile (multiple of 8) when the per-sample slab is small,
        # to amortize per-grid-step overhead and fill sublanes.
        rows = max(8, target_bytes // max(1, tile_f * itemsize))
        tile_b = max(8, (min(rows, B) // 8) * 8)
    return tile_b, tile_f


def drop_path(x, drop_prob: float = 0.0, training: bool = False, *, key=None):
    """Matches torch drop_path semantics: out = x / keep_prob * floor(keep_prob + U)."""
    if drop_prob == 0.0 or not training:
        return x
    if key is None:
        raise ValueError(
            "drop_path requires an explicit PRNG `key` when drop_prob > 0 and training=True"
        )

    keep_prob = 1.0 - float(drop_prob)
    B = x.shape[0]
    F = int(math.prod(x.shape[1:])) if x.ndim > 1 else 1

    # random_tensor = floor(keep_prob + U[0,1)) -> {0., 1.} per sample (glue, tiny)
    u = jax.random.uniform(key, (B,), dtype=jnp.float32)
    scale = (jnp.floor(keep_prob + u) / jnp.float32(keep_prob)).astype(x.dtype)
    scale = scale.reshape(B, 1)

    x2 = x.reshape(B, F)
    itemsize = jnp.dtype(x.dtype).itemsize
    tile_b, tile_f = _choose_tiles(B, F, itemsize)
    grid = (pl.cdiv(B, tile_b), pl.cdiv(F, tile_f))

    out2 = pl.pallas_call(
        _drop_path_kernel,
        out_shape=jax.ShapeDtypeStruct((B, F), x.dtype),
        grid=grid,
        in_specs=[
            pl.BlockSpec((tile_b, 1), lambda i, j: (i, 0)),        # per-sample scale
            pl.BlockSpec((tile_b, tile_f), lambda i, j: (i, j)),   # x slab
        ],
        out_specs=pl.BlockSpec((tile_b, tile_f), lambda i, j: (i, j)),
        compiler_params=pltpu.CompilerParams(
            dimension_semantics=("parallel", "parallel"),
            vmem_limit_bytes=32 * 1024 * 1024,
        ),
    )(scale, x2)
    return out2.reshape(x.shape)


class DropPath:
    """Stateless port of the PyTorch DropPath module (no parameters)."""

    def __init__(self, drop_prob=None):
        self.drop_prob = drop_prob if drop_prob is not None else 0.0
        self.training = True

    def __call__(self, x, *, key=None):
        return drop_path(x, self.drop_prob, self.training, key=key)


if __name__ == "__main__":
    key = jax.random.PRNGKey(0)
    k_x, k_drop = jax.random.split(key)

    B, N, C = 2, 8, 32  # small ViT-like token tensor (batch, tokens, hidden)
    x = jax.random.normal(k_x, (B, N, C), dtype=jnp.float32)

    module = DropPath(drop_prob=0.1)
    module.training = True
    out = jax.block_until_ready(module(x, key=k_drop))

    # correctness check vs pure-JAX reference (same mask draw, torch semantics)
    keep_prob = 1.0 - 0.1
    u = jax.random.uniform(k_drop, (B,), dtype=jnp.float32)
    mask = jnp.floor(keep_prob + u)
    ref = x / keep_prob * mask[:, None, None]
    assert jnp.allclose(out, ref, atol=1e-6), "mismatch vs reference"

    # eval-mode path is identity
    module.training = False
    out_eval = jax.block_until_ready(module(x, key=k_drop))
    assert jnp.array_equal(out_eval, x)

    print("KERNEL_OK")
</pallas_src>

<mosaic_0001>
module attributes {stable_mosaic.version = 11 : i64} {
  func.func @_drop_path_kernel(%arg0: i32, %arg1: i32, %arg2: memref<2x1xf32, #tpu.memory_space<vmem>>, %arg3: memref<2x256xf32, #tpu.memory_space<vmem>>, %arg4: memref<2x256xf32, #tpu.memory_space<vmem>>) attributes {dimension_semantics = [#tpu.dimension_semantics<parallel>, #tpu.dimension_semantics<parallel>], iteration_bounds = array<i64: 1, 1>, scalar_prefetch = 0 : i64, scratch_operands = 0 : i64, tpu.core_type = #tpu.core_type<tc>, window_params = [{transform_indices = @transform_0, window_bounds = array<i64: 2, 1>}, {transform_indices = @transform_1, window_bounds = array<i64: 2, 256>}, {transform_indices = @transform_2, window_bounds = array<i64: 2, 256>}]} {
    %c0 = arith.constant 0 : index
    %c0_0 = arith.constant 0 : index
    %0 = vector.load %arg3[%c0, %c0_0] : memref<2x256xf32, #tpu.memory_space<vmem>>, vector<2x256xf32>
    %c0_1 = arith.constant 0 : index
    %c0_2 = arith.constant 0 : index
    %1 = vector.load %arg2[%c0_1, %c0_2] : memref<2x1xf32, #tpu.memory_space<vmem>>, vector<2x1xf32>
    %2 = vector.broadcast %1 : vector<2x1xf32> to vector<2x256xf32>
    %3 = arith.mulf %0, %2 : vector<2x256xf32>
    %c0_3 = arith.constant 0 : index
    %c0_4 = arith.constant 0 : index
    %4 = vector.load %arg4[%c0_3, %c0_4] : memref<2x256xf32, #tpu.memory_space<vmem>>, vector<2x256xf32>
    tpu.vector_store %arg4[%c0_3, %c0_4], %3 {strides = array<i32>} : memref<2x256xf32, #tpu.memory_space<vmem>>, vector<2x256xf32>,
    return
  }
  func.func @transform_0(%arg0: i32, %arg1: i32) -> (i32, i32) {
    %c0_i32 = arith.constant 0 : i32
    %c0_i32_0 = arith.constant 0 : i32
    return %arg0, %c0_i32 : i32, i32
  }
  func.func @transform_1(%arg0: i32, %arg1: i32) -> (i32, i32) {
    %c0_i32 = arith.constant 0 : i32
    return %arg0, %arg1 : i32, i32
  }
  func.func @transform_2(%arg0: i32, %arg1: i32) -> (i32, i32) {
    %c0_i32 = arith.constant 0 : i32
    return %arg0, %arg1 : i32, i32
  }
}

</mosaic_0001>

<llo_original>
// kernel: tpu_custom_call.1
$region0: #{tpu_custom_call.1}
  #allocation0 [shape = 'u32[]', space=smem, size = 0x4, offset = 0x4, fixed_abs, tag = 'smem constant byte address 0x4 - core index']
  #allocation1 [shape = 'u32[72,128]{1,0:T(1,128)}', space=vmem, size = 0x9000, scoped, tag = 'internal scratch']
  %s0 = inlined_call_operand.vmem [shape: f32[2,1], index: 0, kind: input, shape index: {}]
  %s1 = inlined_call_operand.hbm [shape: f32[2,256], index: 1, kind: input, shape index: {}]
  %s2 = inlined_call_operand.hbm [shape: f32[2,256], index: 2, kind: output, shape index: {}]
  %s3 = sld [smem:[#allocation0]]
  $region22: #{tpu_custom_call.1} parent=0
    _
  %s5 = ssub.s32 1, %s3
  %s6 = scalar_select 0, %s5, %s3
  $region1: #{tpu_custom_call.1} parent=0
    #allocation2 [shape = 'u8[2048]{0}', space=vmem, size = 0x800, scoped, tag = 'input window, operand 1, single buffered']
    #allocation3 [shape = 's32[1]{0}', space=sflag, size = 0x4, scoped, tag = 'scoped memory for tpu_custom_call.1']
    #allocation4 [shape = 's32[1]{0}', space=sflag, size = 0x4, scoped, tag = 'scoped memory for tpu_custom_call.1']
    #allocation5 [shape = 'u8[2048]{0}', space=vmem, size = 0x800, scoped, tag = 'output window, operand 0, single buffered']
    %7 = vsyncpa [#allocation3], 0
    %8 = vsyncpa [#allocation4], 0
    // Predicated region
    $region2: #{tpu_custom_call.1} parent=1 // pred_check
      _
    $region3: #{tpu_custom_call.1} parent=1 // pred_check_branch
      %10 = sbr.rel (0) target = $region5
    $region4: #{tpu_custom_call.1} parent=1 // pred_region
      _
    $region5: #{tpu_custom_call.1} parent=1 // pred_fallthru
      _
    // Predicated region
    $region6: #{tpu_custom_call.1} parent=1 // pred_check
      _
    $region7: #{tpu_custom_call.1} parent=1 // pred_check_branch
      %12 = sbr.rel (0) target = $region9
    $region8: #{tpu_custom_call.1} parent=1 // pred_region
      %14 = vsyncadd [#allocation3], 0
      %s16 = sshll.u32 %s1, 4
      %s17 = int_to_ptr.hbm [resolvable:$true] %s16
      %s18 = sshll.u32 [#allocation2], 4
      %s19 = int_to_ptr.vmem [resolvable:$true] %s18
      %21 = dma.hbm_to_vmem [thread:$0]  %s17, 64, %s19, [#allocation3]
    $region9: #{tpu_custom_call.1} parent=1 // pred_fallthru
      _
    // Predicated region
    $region10: #{tpu_custom_call.1} parent=1 // pred_check
      _
    $region11: #{tpu_custom_call.1} parent=1 // pred_check_branch
      %23 = sbr.rel (0) target = $region13
    $region12: #{tpu_custom_call.1} parent=1 // pred_region
      %25 = dma.done [#allocation3], 64
    $region13: #{tpu_custom_call.1} parent=1 // pred_fallthru
      _
    %v26 = vld [vmem:[#allocation2] sm:$0xf]
    %v27 = vld [vmem:[%s0] sm:$0x3]
    %29 = vset.pattern.permute.xlu0 0
    %30 = vperm.xlu0 %29, %v27
    %v31 = vpop.permute.xlu0 %30
    %v33 = vunpack.c.l.s4 269488144
    %v34 = vunpack.c.0.s8 %v33
    %v35 = vperm.slane %v31, %v34
    %v37 = vmul.f32 %v26, %v35
    %38 = vst [vmem:[#allocation5] sm:$0xf] %v37
    // Predicated region
    $region14: #{tpu_custom_call.1} parent=1 // pred_check
      _
    $region15: #{tpu_custom_call.1} parent=1 // pred_check_branch
      %40 = sbr.rel (0) target = $region17
    $region16: #{tpu_custom_call.1} parent=1 // pred_region
      %42 = vsyncadd [#allocation4], 0
      %s44 = sshll.u32 [#allocation5], 4
      %s45 = int_to_ptr.vmem [resolvable:$true] %s44
      %s46 = sshll.u32 %s2, 4
      %s47 = int_to_ptr.hbm [resolvable:$true] %s46
      %49 = dma.vmem_to_hbm [thread:$0]  %s45, 64, %s47, [#allocation4]
    $region17: #{tpu_custom_call.1} parent=1 // pred_fallthru
      _
    // Predicated region
    $region18: #{tpu_custom_call.1} parent=1 // pred_check
      _
    $region19: #{tpu_custom_call.1} parent=1 // pred_check_branch
      %51 = sbr.rel (0) target = $region21
    $region20: #{tpu_custom_call.1} parent=1 // pred_region
      %53 = dma.done [#allocation4], 64
    $region21: #{tpu_custom_call.1} parent=1 // pred_fallthru
      _
    %54 = vsyncpa [#allocation3], 1
    %55 = vsyncpa [#allocation4], 1

</llo_original>
